<compile_context>
chip_gen: v7x
topology: tpu7x:2x2x1
jax: 0.10.0
libtpu: 0.0.40
codegen_flags: <defaults>
</compile_context>

<pallas_src>
import functools

import jax
import jax.numpy as jnp
from jax.experimental import pallas as pl
from jax.experimental.pallas import tpu as pltpu

LANES = 128          # lane-dense padded width used for every hidden layer
_OUT = 2             # true number of classes (fc4)
_NEG_BIG = -1e30     # acts as -inf for the padded softmax lanes


def _round_up(n, m):
    return ((n + m - 1) // m) * m


def mlp_kernel(x_ref, w_ref, b_ref, o_ref, *, k_in, approx_recip):
    """Whole 4-layer forward for one (TB, k_in) batch tile -> (TB, 2) probs."""
    # Unpack the resident weight slab with static, tile-aligned (free) slices.
    w1 = w_ref[0:k_in, :]                          # (k_in, 128)
    w2 = w_ref[k_in:k_in + LANES, :]               # (128, 128)
    w3 = w_ref[k_in + LANES:k_in + 2 * LANES, :]
    w4 = w_ref[k_in + 2 * LANES:k_in + 3 * LANES, :]
    b = b_ref[...]                                 # (4, 128) f32
    b1, b2, b3, b4 = b[0:1, :], b[1:2, :], b[2:3, :], b[3:4, :]

    cdt = w_ref.dtype                              # MXU operand dtype (f32 or bf16)
    x = x_ref[...].astype(cdt)

    # fc1..fc3: MXU dot (bf16|f32 operands), f32 accumulate, f32 bias + ReLU (VPU).
    h = jnp.maximum(jnp.dot(x, w1, preferred_element_type=jnp.float32) + b1, 0.0)
    h = jnp.maximum(jnp.dot(h.astype(cdt), w2, preferred_element_type=jnp.float32) + b2, 0.0)
    h = jnp.maximum(jnp.dot(h.astype(cdt), w3, preferred_element_type=jnp.float32) + b3, 0.0)

    # fc4 + softmax over the class axis.  Padded lanes carry a -1e30 bias so
    # exp() underflows to 0 and only the 2 real logits enter the denominator.
    logits = jnp.dot(h.astype(cdt), w4, preferred_element_type=jnp.float32) + b4
    m = jnp.max(logits, axis=-1, keepdims=True)
    e = jnp.exp(logits - m)
    denom = jnp.sum(e, axis=-1, keepdims=True)
    inv = pl.reciprocal(denom, approx=approx_recip)
    # Narrow store: only the 2 real class lanes go back to HBM.
    o_ref[...] = (e[:, :_OUT] * inv).astype(o_ref.dtype)


def pack_params(params, d_in, matmul_dtype=jnp.float32):
    """Pack the four (W, b) pairs into one lane-padded W slab + one bias slab.

    Call ONCE (at init) and reuse the slabs across forwards."""
    (w1, b1), (w2, b2), (w3, b3), (w4, b4) = (
        params["fc1"], params["fc2"], params["fc3"], params["fc4"])
    r1 = _round_up(d_in, 16)   # sublane/tile-aligned K for both f32 and bf16

    def pad_w(w, rows):
        buf = jnp.zeros((rows, LANES), jnp.float32)
        return buf.at[:w.shape[0], :w.shape[1]].set(w)

    w_slab = jnp.concatenate(
        [pad_w(w1, r1), pad_w(w2, LANES), pad_w(w3, LANES), pad_w(w4, LANES)],
        axis=0).astype(matmul_dtype)                                # (r1 + 384, 128)

    def pad_b(bv, fill=0.0):
        buf = jnp.full((1, LANES), fill, jnp.float32)
        return buf.at[:, :bv.shape[-1]].set(bv.reshape(1, -1))

    b_slab = jnp.concatenate(
        [pad_b(b1), pad_b(b2), pad_b(b3), pad_b(b4, fill=_NEG_BIG)],
        axis=0)                                                     # (4, 128) f32
    return w_slab, b_slab


def _choose_tile(B, batch_tile):
    """Batch tile: big enough to amortize step overhead, but always >=2 grid
    steps when B allows, so v7x's second TensorCore gets work."""
    half = _round_up(pl.cdiv(B, 2), 8)
    tb = min(max(8, (batch_tile // 8) * 8), half)
    if tb >= B:
        return B            # single full-extent tile (always a legal block)
    return tb               # multiple of 8 -> legal with grid = cdiv(B, tb)


def net_forward(x, w_slab, b_slab, *, batch_tile=4096):
    """x: (B, d_in) f32, prebuilt slabs -> (B, 2) f32 softmax probabilities."""
    B, d_in = x.shape
    rows = w_slab.shape[0]
    k_in = rows - 3 * LANES                     # = round_up(d_in, 16)
    if d_in != k_in:                            # keep K tile-aligned (free slices)
        x = jnp.pad(x, ((0, 0), (0, k_in - d_in)))

    tb = _choose_tile(B, batch_tile)
    grid = (pl.cdiv(B, tb),)

    kernel = functools.partial(
        mlp_kernel, k_in=k_in,
        approx_recip=(w_slab.dtype != jnp.float32))   # exact div on strict f32 path

    return pl.pallas_call(
        kernel,
        out_shape=jax.ShapeDtypeStruct((B, _OUT), jnp.float32),
        grid_spec=pltpu.PrefetchScalarGridSpec(
            num_scalar_prefetch=0,
            grid=grid,
            in_specs=[
                pl.BlockSpec((tb, k_in), lambda i: (i, 0)),      # x streams over batch
                pl.BlockSpec((rows, LANES), lambda i: (0, 0)),   # weights resident in VMEM
                pl.BlockSpec((4, LANES), lambda i: (0, 0)),      # biases resident in VMEM
            ],
            out_specs=pl.BlockSpec((tb, _OUT), lambda i: (i, 0)),  # narrow (tb, 2) store
        ),
        compiler_params=pltpu.CompilerParams(
            dimension_semantics=("parallel",),   # batch tiles split across TCs (v7x)
        ),
    )(x, w_slab, b_slab)


def init_params(key, dim_input):
    """Deterministic init mimicking nn.Linear's uniform(-1/sqrt(fan_in), ...)."""
    dims = [(dim_input, 16), (16, 32), (32, 16), (16, 2)]
    names = ["fc1", "fc2", "fc3", "fc4"]
    params = {}
    for name, (fan_in, fan_out) in zip(names, dims):
        key, kw, kb = jax.random.split(key, 3)
        bound = 1.0 / jnp.sqrt(jnp.float32(fan_in))
        W = jax.random.uniform(kw, (fan_in, fan_out), jnp.float32, -bound, bound)
        b = jax.random.uniform(kb, (1, fan_out), jnp.float32, -bound, bound)
        params[name] = (W, b)
    return params


def reference_forward(x, params):
    h = x
    for name in ["fc1", "fc2", "fc3"]:
        W, b = params[name]
        h = jnp.maximum(h @ W + b, 0.0)
    W, b = params["fc4"]
    return jax.nn.softmax(h @ W + b, axis=-1)


if __name__ == "__main__":
    key = jax.random.PRNGKey(0)
    dim_input = 32
    batch = 8

    key, kx = jax.random.split(key)
    x = jax.random.normal(kx, (batch, dim_input), jnp.float32)
    params = init_params(key, dim_input)
    ref = reference_forward(x, params)

    # Slabs are packed ONCE (hoisted out of the per-call path).
    w_f32, b_f32 = pack_params(params, dim_input, jnp.float32)
    w_bf16, b_bf16 = pack_params(params, dim_input, jnp.bfloat16)

    # 1) Strict f32 path (exact PyTorch forward semantics, exact reciprocal).
    out = jax.block_until_ready(net_forward(x, w_f32, b_f32))
    assert out.shape == (batch, 2)
    assert jnp.allclose(out, ref, atol=1e-5, rtol=1e-5)
    assert jnp.allclose(jnp.sum(out, axis=-1), 1.0, atol=1e-5)

    # 2) bf16 MXU-operand perf path (valid on v5e/v6e/v7x); f32 accumulate,
    #    approx reciprocal on the EUP.
    out_bf16 = jax.block_until_ready(net_forward(x, w_bf16, b_bf16))
    assert out_bf16.shape == (batch, 2)
    assert jnp.allclose(out_bf16, ref, atol=3e-2)
    assert jnp.allclose(jnp.sum(out_bf16, axis=-1), 1.0, atol=2e-3)

    # 3) Multi-step batch grid: weights stay resident, x/out stream in row tiles.
    xb = jax.random.normal(jax.random.PRNGKey(1), (32, dim_input), jnp.float32)
    out_b = jax.block_until_ready(net_forward(xb, w_f32, b_f32, batch_tile=8))
    assert jnp.allclose(out_b, reference_forward(xb, params), atol=1e-5, rtol=1e-5)

    # 4) Default tiling with >=2 grid steps (v7x megacore split) + ragged last
    #    tile (B not a multiple of 8): masked edge writeback, valid rows exact.
    xc = jax.random.normal(jax.random.PRNGKey(2), (20, dim_input), jnp.float32)
    out_c = jax.block_until_ready(net_forward(xc, w_f32, b_f32))
    assert out_c.shape == (20, 2)
    assert jnp.allclose(out_c, reference_forward(xc, params), atol=1e-5, rtol=1e-5)

    print("KERNEL_OK")
</pallas_src>

<mosaic_0001>
module attributes {stable_mosaic.version = 11 : i64} {
  func.func @mlp_kernel(%arg0: i32, %arg1: memref<8x32xf32, #tpu.memory_space<vmem>>, %arg2: memref<416x128xf32, #tpu.memory_space<vmem>>, %arg3: memref<4x128xf32, #tpu.memory_space<vmem>>, %arg4: memref<8x2xf32, #tpu.memory_space<vmem>>) attributes {dimension_semantics = [#tpu.dimension_semantics<parallel>], iteration_bounds = array<i64: 1>, scalar_prefetch = 0 : i64, scratch_operands = 0 : i64, tpu.core_type = #tpu.core_type<tc>, window_params = [{transform_indices = @transform_0, window_bounds = array<i64: 8, 32>}, {pipeline_mode = #tpu.pipeline_mode<synchronous>, transform_indices = @transform_1, window_bounds = array<i64: 416, 128>}, {pipeline_mode = #tpu.pipeline_mode<synchronous>, transform_indices = @transform_2, window_bounds = array<i64: 4, 128>}, {transform_indices = @transform_3, window_bounds = array<i64: 8, 2>}]} {
    %c0 = arith.constant 0 : index
    %c0_0 = arith.constant 0 : index
    %0 = vector.load %arg2[%c0, %c0_0] : memref<416x128xf32, #tpu.memory_space<vmem>>, vector<32x128xf32>
    %c32 = arith.constant 32 : index
    %c0_1 = arith.constant 0 : index
    %1 = vector.load %arg2[%c32, %c0_1] : memref<416x128xf32, #tpu.memory_space<vmem>>, vector<128x128xf32>
    %c160 = arith.constant 160 : index
    %c0_2 = arith.constant 0 : index
    %2 = vector.load %arg2[%c160, %c0_2] : memref<416x128xf32, #tpu.memory_space<vmem>>, vector<128x128xf32>
    %c288 = arith.constant 288 : index
    %c0_3 = arith.constant 0 : index
    %3 = vector.load %arg2[%c288, %c0_3] : memref<416x128xf32, #tpu.memory_space<vmem>>, vector<128x128xf32>
    %c0_4 = arith.constant 0 : index
    %c0_5 = arith.constant 0 : index
    %4 = vector.load %arg3[%c0_4, %c0_5] : memref<4x128xf32, #tpu.memory_space<vmem>>, vector<4x128xf32>
    %5 = vector.extract_strided_slice %4 {offsets = [0, 0], sizes = [1, 128], strides = [1, 1]} : vector<4x128xf32> to vector<1x128xf32>
    %6 = vector.extract_strided_slice %4 {offsets = [1, 0], sizes = [1, 128], strides = [1, 1]} : vector<4x128xf32> to vector<1x128xf32>
    %7 = vector.extract_strided_slice %4 {offsets = [2, 0], sizes = [1, 128], strides = [1, 1]} : vector<4x128xf32> to vector<1x128xf32>
    %8 = vector.extract_strided_slice %4 {offsets = [3, 0], sizes = [1, 128], strides = [1, 1]} : vector<4x128xf32> to vector<1x128xf32>
    %c0_6 = arith.constant 0 : index
    %c0_7 = arith.constant 0 : index
    %9 = vector.load %arg1[%c0_6, %c0_7] : memref<8x32xf32, #tpu.memory_space<vmem>>, vector<8x32xf32>
    %cst = arith.constant dense<0.000000e+00> : vector<8x128xf32>
    %10 = tpu.matmul %9, %0, %cst {dimension_numbers = #tpu.dot_dimension_numbers<[1], [0], [0], [1], [0, 0, 1, 1], [], []>} : vector<8x32xf32>, vector<32x128xf32>, vector<8x128xf32> -> vector<8x128xf32>
    %11 = vector.broadcast %5 : vector<1x128xf32> to vector<8x128xf32>
    %12 = arith.addf %10, %11 : vector<8x128xf32>
    %cst_8 = arith.constant 0.000000e+00 : f32
    %13 = vector.broadcast %cst_8 : f32 to vector<8x128xf32>
    %14 = arith.maximumf %12, %13 : vector<8x128xf32>
    %cst_9 = arith.constant dense<0.000000e+00> : vector<8x128xf32>
    %15 = tpu.matmul %14, %1, %cst_9 {dimension_numbers = #tpu.dot_dimension_numbers<[1], [0], [0], [1], [0, 0, 1, 1], [], []>} : vector<8x128xf32>, vector<128x128xf32>, vector<8x128xf32> -> vector<8x128xf32>
    %16 = vector.broadcast %6 : vector<1x128xf32> to vector<8x128xf32>
    %17 = arith.addf %15, %16 : vector<8x128xf32>
    %cst_10 = arith.constant 0.000000e+00 : f32
    %18 = vector.broadcast %cst_10 : f32 to vector<8x128xf32>
    %19 = arith.maximumf %17, %18 : vector<8x128xf32>
    %cst_11 = arith.constant dense<0.000000e+00> : vector<8x128xf32>
    %20 = tpu.matmul %19, %2, %cst_11 {dimension_numbers = #tpu.dot_dimension_numbers<[1], [0], [0], [1], [0, 0, 1, 1], [], []>} : vector<8x128xf32>, vector<128x128xf32>, vector<8x128xf32> -> vector<8x128xf32>
    %21 = vector.broadcast %7 : vector<1x128xf32> to vector<8x128xf32>
    %22 = arith.addf %20, %21 : vector<8x128xf32>
    %cst_12 = arith.constant 0.000000e+00 : f32
    %23 = vector.broadcast %cst_12 : f32 to vector<8x128xf32>
    %24 = arith.maximumf %22, %23 : vector<8x128xf32>
    %cst_13 = arith.constant dense<0.000000e+00> : vector<8x128xf32>
    %25 = tpu.matmul %24, %3, %cst_13 {dimension_numbers = #tpu.dot_dimension_numbers<[1], [0], [0], [1], [0, 0, 1, 1], [], []>} : vector<8x128xf32>, vector<128x128xf32>, vector<8x128xf32> -> vector<8x128xf32>
    %26 = vector.broadcast %8 : vector<1x128xf32> to vector<8x128xf32>
    %27 = arith.addf %25, %26 : vector<8x128xf32>
    %cst_14 = arith.constant dense<0xFF800000> : vector<8xf32>
    %28 = vector.multi_reduction <maximumf>, %27, %cst_14 [1] : vector<8x128xf32> to vector<8xf32>
    %29 = vector.shape_cast %28 : vector<8xf32> to vector<8x1xf32>
    %30 = vector.broadcast %29 : vector<8x1xf32> to vector<8x128xf32>
    %31 = arith.subf %27, %30 : vector<8x128xf32>
    %32 = math.exp %31 : vector<8x128xf32>
    %cst_15 = arith.constant dense<0.000000e+00> : vector<8xf32>
    %33 = vector.multi_reduction <add>, %32, %cst_15 [1] : vector<8x128xf32> to vector<8xf32>
    %34 = vector.shape_cast %33 : vector<8xf32> to vector<8x1xf32>
    %35 = tpu.reciprocal %34 : vector<8x1xf32> -> vector<8x1xf32>
    %36 = vector.extract_strided_slice %32 {offsets = [0, 0], sizes = [8, 2], strides = [1, 1]} : vector<8x128xf32> to vector<8x2xf32>
    %37 = vector.broadcast %35 : vector<8x1xf32> to vector<8x2xf32>
    %38 = arith.mulf %36, %37 : vector<8x2xf32>
    %c0_16 = arith.constant 0 : index
    %c0_17 = arith.constant 0 : index
    %39 = vector.load %arg4[%c0_16, %c0_17] : memref<8x2xf32, #tpu.memory_space<vmem>>, vector<8x2xf32>
    tpu.vector_store %arg4[%c0_16, %c0_17], %38 {strides = array<i32>} : memref<8x2xf32, #tpu.memory_space<vmem>>, vector<8x2xf32>,
    return
  }
  func.func @transform_0(%arg0: i32) -> (i32, i32) {
    %c0_i32 = arith.constant 0 : i32
    %c0_i32_0 = arith.constant 0 : i32
    return %arg0, %c0_i32 : i32, i32
  }
  func.func @transform_1(%arg0: i32) -> (i32, i32) {
    %c0_i32 = arith.constant 0 : i32
    %c0_i32_0 = arith.constant 0 : i32
    %c0_i32_1 = arith.constant 0 : i32
    return %c0_i32, %c0_i32_0 : i32, i32
  }
  func.func @transform_2(%arg0: i32) -> (i32, i32) {
    %c0_i32 = arith.constant 0 : i32
    %c0_i32_0 = arith.constant 0 : i32
    %c0_i32_1 = arith.constant 0 : i32
    return %c0_i32, %c0_i32_0 : i32, i32
  }
  func.func @transform_3(%arg0: i32) -> (i32, i32) {
    %c0_i32 = arith.constant 0 : i32
    %c0_i32_0 = arith.constant 0 : i32
    return %arg0, %c0_i32 : i32, i32
  }
}

</mosaic_0001>

<llo_original>
// kernel: tpu_custom_call.1
$region0: #{tpu_custom_call.1}
  #allocation0 [shape = 'u32[]', space=smem, size = 0x4, offset = 0x4, fixed_abs, tag = 'smem constant byte address 0x4 - core index']
  #allocation1 [shape = 'u32[144,128]{1,0:T(1,128)}', space=vmem, size = 0x12000, scoped, tag = 'internal scratch']
  %s0 = inlined_call_operand.hbm [shape: f32[8,32], index: 0, kind: input, shape index: {}]
  %s1 = inlined_call_operand.hbm [shape: f32[416,128], index: 1, kind: input, shape index: {}]
  %s2 = inlined_call_operand.vmem [shape: f32[4,128], index: 2, kind: input, shape index: {}]
  %s3 = inlined_call_operand.vmem [shape: f32[8,2], index: 3, kind: output, shape index: {}]
  %s4 = sld [smem:[#allocation0]]
  $region30: #{tpu_custom_call.1} parent=0
    _
  %s6 = ssub.s32 1, %s4
  %s7 = scalar_select 0, %s6, %s4
  $region1: #{tpu_custom_call.1} parent=0
    #allocation2 [shape = 'u8[4096]{0}', space=vmem, size = 0x1000, scoped, tag = 'input window, operand 0, single buffered']
    #allocation3 [shape = 's32[1]{0}', space=sflag, size = 0x4, scoped, tag = 'scoped memory for tpu_custom_call.1']
    #allocation4 [shape = 'u8[212992]{0}', space=vmem, size = 0x34000, scoped, tag = 'input window, operand 1, single buffered']
    #allocation5 [shape = 's32[1]{0}', space=sflag, size = 0x4, scoped, tag = 'scoped memory for tpu_custom_call.1']
    %8 = vsyncpa [#allocation3], 0
    %9 = vsyncpa [#allocation5], 0
    // Predicated region
    $region2: #{tpu_custom_call.1} parent=1 // pred_check
      _
    $region3: #{tpu_custom_call.1} parent=1 // pred_check_branch
      %11 = sbr.rel (0) target = $region5
    $region4: #{tpu_custom_call.1} parent=1 // pred_region
      %s13 = ssub.s32 128, 128
      %14 = vsyncadd [#allocation3], %s13
      %s16 = sshll.u32 [#allocation2], 4
      %s17 = int_to_ptr.vmem [resolvable:$true] %s16
      %19 = dma.hbm_to_vmem [thread:$0]  %s0, 128, %s17, [#allocation3]
    $region5: #{tpu_custom_call.1} parent=1 // pred_fallthru
      _
    // Predicated region
    $region6: #{tpu_custom_call.1} parent=1 // pred_check
      _
    $region7: #{tpu_custom_call.1} parent=1 // pred_check_branch
      %21 = sbr.rel (0) target = $region9
    $region8: #{tpu_custom_call.1} parent=1 // pred_region
      %s23 = ssub.s32 6656, 6656
      %24 = vsyncadd [#allocation5], %s23
      %s25 = sshll.u32 [#allocation4], 4
      %s26 = int_to_ptr.vmem [resolvable:$true] %s25
      %31 = dma.hbm_to_vmem [thread:$0]  %s1, 6656, %s26, [#allocation5], 128, 128, 8
    $region9: #{tpu_custom_call.1} parent=1 // pred_fallthru
      _
    // Predicated region
    $region10: #{tpu_custom_call.1} parent=1 // pred_check
      _
    $region11: #{tpu_custom_call.1} parent=1 // pred_check_branch
      %33 = sbr.rel (0) target = $region13
    $region12: #{tpu_custom_call.1} parent=1 // pred_region
      _
    $region13: #{tpu_custom_call.1} parent=1 // pred_fallthru
      _
    // Predicated region
    $region14: #{tpu_custom_call.1} parent=1 // pred_check
      _
    $region15: #{tpu_custom_call.1} parent=1 // pred_check_branch
      %35 = sbr.rel (0) target = $region17
    $region16: #{tpu_custom_call.1} parent=1 // pred_region
      %36 = dma.done [#allocation3], 128
    $region17: #{tpu_custom_call.1} parent=1 // pred_fallthru
      _
    // Predicated region
    $region18: #{tpu_custom_call.1} parent=1 // pred_check
      _
    $region19: #{tpu_custom_call.1} parent=1 // pred_check_branch
      %38 = sbr.rel (0) target = $region21
    $region20: #{tpu_custom_call.1} parent=1 // pred_region
      %39 = dma.done [#allocation5], 6656
    $region21: #{tpu_custom_call.1} parent=1 // pred_fallthru
      _
    %v40 = vld [vmem:[#allocation4] sm:$0xff]
    %v41 = vld [vmem:[#allocation4 + $0x8] sm:$0xff]
    %v42 = vld [vmem:[#allocation4 + $0x10] sm:$0xff]
    %v43 = vld [vmem:[#allocation4 + $0x18] sm:$0xff]
    %v44 = vld [vmem:[#allocation4 + $0x20] sm:$0xff]
    %v45 = vld [vmem:[#allocation4 + $0x28] sm:$0xff]
    %v46 = vld [vmem:[#allocation4 + $0x30] sm:$0xff]
    %v47 = vld [vmem:[#allocation4 + $0x38] sm:$0xff]
    %v48 = vld [vmem:[#allocation4 + $0x40] sm:$0xff]
    %v49 = vld [vmem:[#allocation4 + $0x48] sm:$0xff]
    %v50 = vld [vmem:[#allocation4 + $0x50] sm:$0xff]
    %v51 = vld [vmem:[#allocation4 + $0x58] sm:$0xff]
    %v52 = vld [vmem:[#allocation4 + $0x60] sm:$0xff]
    %v53 = vld [vmem:[#allocation4 + $0x68] sm:$0xff]
    %v54 = vld [vmem:[#allocation4 + $0x70] sm:$0xff]
    %v55 = vld [vmem:[#allocation4 + $0x78] sm:$0xff]
    %v56 = vld [vmem:[#allocation4 + $0x80] sm:$0xff]
    %v57 = vld [vmem:[#allocation4 + $0x88] sm:$0xff]
    %v58 = vld [vmem:[#allocation4 + $0x90] sm:$0xff]
    %v59 = vld [vmem:[#allocation4 + $0x98] sm:$0xff]
    %v60 = vld [vmem:[#allocation4 + $0xa0] sm:$0xff]
    %v61 = vld [vmem:[#allocation4 + $0xa8] sm:$0xff]
    %v62 = vld [vmem:[#allocation4 + $0xb0] sm:$0xff]
    %v63 = vld [vmem:[#allocation4 + $0xb8] sm:$0xff]
    %v64 = vld [vmem:[#allocation4 + $0xc0] sm:$0xff]
    %v65 = vld [vmem:[#allocation4 + $0xc8] sm:$0xff]
    %v66 = vld [vmem:[#allocation4 + $0xd0] sm:$0xff]
    %v67 = vld [vmem:[#allocation4 + $0xd8] sm:$0xff]
    %v68 = vld [vmem:[#allocation4 + $0xe0] sm:$0xff]
    %v69 = vld [vmem:[#allocation4 + $0xe8] sm:$0xff]
    %v70 = vld [vmem:[#allocation4 + $0xf0] sm:$0xff]
    %v71 = vld [vmem:[#allocation4 + $0xf8] sm:$0xff]
    %v72 = vld [vmem:[#allocation4 + $0x100] sm:$0xff]
    %v73 = vld [vmem:[#allocation4 + $0x108] sm:$0xff]
    %v74 = vld [vmem:[#allocation4 + $0x110] sm:$0xff]
    %v75 = vld [vmem:[#allocation4 + $0x118] sm:$0xff]
    %v76 = vld [vmem:[#allocation4 + $0x120] sm:$0xff]
    %v77 = vld [vmem:[#allocation4 + $0x128] sm:$0xff]
    %v78 = vld [vmem:[#allocation4 + $0x130] sm:$0xff]
    %v79 = vld [vmem:[#allocation4 + $0x138] sm:$0xff]
    %v80 = vld [vmem:[#allocation4 + $0x140] sm:$0xff]
    %v81 = vld [vmem:[#allocation4 + $0x148] sm:$0xff]
    %v82 = vld [vmem:[#allocation4 + $0x150] sm:$0xff]
    %v83 = vld [vmem:[#allocation4 + $0x158] sm:$0xff]
    %v84 = vld [vmem:[#allocation4 + $0x160] sm:$0xff]
    %v85 = vld [vmem:[#allocation4 + $0x168] sm:$0xff]
    %v86 = vld [vmem:[#allocation4 + $0x170] sm:$0xff]
    %v87 = vld [vmem:[#allocation4 + $0x178] sm:$0xff]
    %v88 = vld [vmem:[#allocation4 + $0x180] sm:$0xff]
    %v89 = vld [vmem:[#allocation4 + $0x188] sm:$0xff]
    %v90 = vld [vmem:[#allocation4 + $0x190] sm:$0xff]
    %v91 = vld [vmem:[#allocation4 + $0x198] sm:$0xff]
    %v92 = vld [vmem:[%s2] sm:$0xf]
    %v93 = vld [vmem:[#allocation2] sm:$0xff]
    %v94 = vlaneseq
    %v95 = vshrl.u32 %v94, 7
    %v96 = vsub.s32 0, %v95
    %v97 = vrot.slane %v92, %v96
    %vm98 = vcmask 261120
    %v100 = vsel %vm98, %v93, 0
    %102 = vmatprep.subr.mxu0 0.0
    %103 = vmatpush1.msra.mxu0 %v40
    %104 = vmatprep.subr.mxu0 0.0
    %105 = vmatpush1.msra.mxu0 %v41
    %106 = vmatprep.subr.mxu0 0.0
    %107 = vmatpush1.msra.mxu0 %v42
    %108 = vmatprep.subr.mxu0 0.0
    %109 = vmatpush1.msra.mxu0 %v43
    %110 = vmatprep.subr.mxu0 0.0
    %111 = vmatpush1.msra.mxu0 0.0
    %112 = vmatprep.subr.mxu0 0.0
    %113 = vmatpush1.msra.mxu0 0.0
    %114 = vmatprep.subr.mxu0 0.0
    %115 = vmatpush1.msra.mxu0 0.0
    %116 = vmatprep.subr.mxu0 0.0
    %117 = vmatpush1.msra.mxu0 0.0
    %118 = vmatprep.subr.mxu0 0.0
    %119 = vmatpush1.msra.mxu0 0.0
    %120 = vmatprep.subr.mxu0 0.0
    %121 = vmatpush1.msra.mxu0 0.0
    %122 = vmatprep.subr.mxu0 0.0
    %123 = vmatpush1.msra.mxu0 0.0
    %124 = vmatprep.subr.mxu0 0.0
    %125 = vmatpush1.msra.mxu0 0.0
    %126 = vmatprep.subr.mxu0 0.0
    %127 = vmatpush1.msra.mxu0 0.0
    %128 = vmatprep.subr.mxu0 0.0
    %129 = vmatpush1.msra.mxu0 0.0
    %130 = vmatprep.subr.mxu0 0.0
    %131 = vmatpush1.msra.mxu0 0.0
    %132 = vmatprep.subr.mxu0 0.0
    %133 = vmatpush1.msra.mxu0 0.0
    %134 = vmatprep.subr.mxu0 0.0
    %135 = vmatpush1.msra.mxu0 0.0
    %136 = vmatprep.subr.mxu0 0.0
    %137 = vmatpush1.msra.mxu0 0.0
    %138 = vmatprep.subr.mxu0 0.0
    %139 = vmatpush1.msra.mxu0 0.0
    %140 = vmatprep.subr.mxu0 0.0
    %141 = vmatpush1.msra.mxu0 0.0
    %142 = vmatprep.subr.mxu0 0.0
    %143 = vmatpush1.msra.mxu0 0.0
    %144 = vmatprep.subr.mxu0 0.0
    %145 = vmatpush1.msra.mxu0 0.0
    %146 = vmatprep.subr.mxu0 0.0
    %147 = vmatpush1.msra.mxu0 0.0
    %148 = vmatprep.subr.mxu0 0.0
    %149 = vmatpush1.msra.mxu0 0.0
    %150 = vmatprep.subr.mxu0 0.0
    %151 = vmatpush1.msra.mxu0 0.0
    %152 = vmatprep.subr.mxu0 0.0
    %153 = vmatpush1.msra.mxu0 0.0
    %154 = vmatprep.subr.mxu0 0.0
    %155 = vmatpush1.msra.mxu0 0.0
    %156 = vmatprep.subr.mxu0 0.0
    %157 = vmatpush1.msra.mxu0 0.0
    %158 = vmatprep.subr.mxu0 0.0
    %159 = vmatpush1.msra.mxu0 0.0
    %160 = vmatprep.subr.mxu0 0.0
    %161 = vmatpush1.msra.mxu0 0.0
    %162 = vmatprep.subr.mxu0 0.0
    %163 = vmatpush1.msra.mxu0 0.0
    %164 = vmatprep.subr.mxu0 0.0
    %165 = vmatpush1.msra.mxu0 0.0
    %166 = vmatprep.mubr.f32.mxu0 0.0
    %167 = vmatmul.mubr.f32.gmra.mrb[0].mxu0 %v100
    %v168 = vpop.f32.mrb[0].mxu0
    %v169 = vadd.f32 %v97, %v168
    %v170 = vpop.f32.mrb[0].mxu0
    %171 = vdwg.mxu0
    %v172 = vmax.f32 %v169, 0.0
    %v173 = vlaneseq
    %v174 = vshrl.u32 %v173, 7
    %v175 = vsub.s32 1, %v174
    %v176 = vrot.slane %v92, %v175
    %177 = vmatprep.subr.mxu0 0.0
    %178 = vmatpush1.msra.mxu0 %v44
    %179 = vmatprep.subr.mxu0 0.0
    %180 = vmatpush1.msra.mxu0 %v45
    %181 = vmatprep.subr.mxu0 0.0
    %182 = vmatpush1.msra.mxu0 %v46
    %183 = vmatprep.subr.mxu0 0.0
    %184 = vmatpush1.msra.mxu0 %v47
    %185 = vmatprep.subr.mxu0 0.0
    %186 = vmatpush1.msra.mxu0 %v48
    %187 = vmatprep.subr.mxu0 0.0
    %188 = vmatpush1.msra.mxu0 %v49
    %189 = vmatprep.subr.mxu0 0.0
    %190 = vmatpush1.msra.mxu0 %v50
    %191 = vmatprep.subr.mxu0 0.0
    %192 = vmatpush1.msra.mxu0 %v51
    %193 = vmatprep.subr.mxu0 0.0
    %194 = vmatpush1.msra.mxu0 %v52
    %195 = vmatprep.subr.mxu0 0.0
    %196 = vmatpush1.msra.mxu0 %v53
    %197 = vmatprep.subr.mxu0 0.0
    %198 = vmatpush1.msra.mxu0 %v54
    %199 = vmatprep.subr.mxu0 0.0
    %200 = vmatpush1.msra.mxu0 %v55
    %201 = vmatprep.subr.mxu0 0.0
    %202 = vmatpush1.msra.mxu0 %v56
    %203 = vmatprep.subr.mxu0 0.0
    %204 = vmatpush1.msra.mxu0 %v57
    %205 = vmatprep.subr.mxu0 0.0
    %206 = vmatpush1.msra.mxu0 %v58
    %207 = vmatprep.subr.mxu0 0.0
    %208 = vmatpush1.msra.mxu0 %v59
    %209 = vmatprep.subr.mxu0 0.0
    %210 = vmatpush1.msra.mxu0 0.0
    %211 = vmatprep.subr.mxu0 0.0
    %212 = vmatpush1.msra.mxu0 0.0
    %213 = vmatprep.subr.mxu0 0.0
    %214 = vmatpush1.msra.mxu0 0.0
    %215 = vmatprep.subr.mxu0 0.0
    %216 = vmatpush1.msra.mxu0 0.0
    %217 = vmatprep.subr.mxu0 0.0
    %218 = vmatpush1.msra.mxu0 0.0
    %219 = vmatprep.subr.mxu0 0.0
    %220 = vmatpush1.msra.mxu0 0.0
    %221 = vmatprep.subr.mxu0 0.0
    %222 = vmatpush1.msra.mxu0 0.0
    %223 = vmatprep.subr.mxu0 0.0
    %224 = vmatpush1.msra.mxu0 0.0
    %225 = vmatprep.subr.mxu0 0.0
    %226 = vmatpush1.msra.mxu0 0.0
    %227 = vmatprep.subr.mxu0 0.0
    %228 = vmatpush1.msra.mxu0 0.0
    %229 = vmatprep.subr.mxu0 0.0
    %230 = vmatpush1.msra.mxu0 0.0
    %231 = vmatprep.subr.mxu0 0.0
    %232 = vmatpush1.msra.mxu0 0.0
    %233 = vmatprep.subr.mxu0 0.0
    %234 = vmatpush1.msra.mxu0 0.0
    %235 = vmatprep.subr.mxu0 0.0
    %236 = vmatpush1.msra.mxu0 0.0
    %237 = vmatprep.subr.mxu0 0.0
    %238 = vmatpush1.msra.mxu0 0.0
    %239 = vmatprep.subr.mxu0 0.0
    %240 = vmatpush1.msra.mxu0 0.0
    %241 = vmatprep.mubr.f32.mxu0 0.0
    %242 = vmatmul.mubr.f32.gmra.mrb[0].mxu0 %v172
    %v243 = vpop.f32.mrb[0].mxu0
    %v244 = vadd.f32 %v176, %v243
    %v245 = vpop.f32.mrb[0].mxu0
    %246 = vdwg.mxu0
    %v247 = vmax.f32 %v244, 0.0
    %v248 = vlaneseq
    %v249 = vshrl.u32 %v248, 7
    %v250 = vsub.s32 2, %v249
    %v251 = vrot.slane %v92, %v250
    %252 = vmatprep.subr.mxu0 0.0
    %253 = vmatpush1.msra.mxu0 %v60
    %254 = vmatprep.subr.mxu0 0.0
    %255 = vmatpush1.msra.mxu0 %v61
    %256 = vmatprep.subr.mxu0 0.0
    %257 = vmatpush1.msra.mxu0 %v62
    %258 = vmatprep.subr.mxu0 0.0
    %259 = vmatpush1.msra.mxu0 %v63
    %260 = vmatprep.subr.mxu0 0.0
    %261 = vmatpush1.msra.mxu0 %v64
    %262 = vmatprep.subr.mxu0 0.0
    %263 = vmatpush1.msra.mxu0 %v65
    %264 = vmatprep.subr.mxu0 0.0
    %265 = vmatpush1.msra.mxu0 %v66
    %266 = vmatprep.subr.mxu0 0.0
    %267 = vmatpush1.msra.mxu0 %v67
    %268 = vmatprep.subr.mxu0 0.0
    %269 = vmatpush1.msra.mxu0 %v68
    %270 = vmatprep.subr.mxu0 0.0
    %271 = vmatpush1.msra.mxu0 %v69
    %272 = vmatprep.subr.mxu0 0.0
    %273 = vmatpush1.msra.mxu0 %v70
    %274 = vmatprep.subr.mxu0 0.0
    %275 = vmatpush1.msra.mxu0 %v71
    %276 = vmatprep.subr.mxu0 0.0
    %277 = vmatpush1.msra.mxu0 %v72
    %278 = vmatprep.subr.mxu0 0.0
    %279 = vmatpush1.msra.mxu0 %v73
    %280 = vmatprep.subr.mxu0 0.0
    %281 = vmatpush1.msra.mxu0 %v74
    %282 = vmatprep.subr.mxu0 0.0
    %283 = vmatpush1.msra.mxu0 %v75
    %284 = vmatprep.subr.mxu0 0.0
    %285 = vmatpush1.msra.mxu0 0.0
    %286 = vmatprep.subr.mxu0 0.0
    %287 = vmatpush1.msra.mxu0 0.0
    %288 = vmatprep.subr.mxu0 0.0
    %289 = vmatpush1.msra.mxu0 0.0
    %290 = vmatprep.subr.mxu0 0.0
    %291 = vmatpush1.msra.mxu0 0.0
    %292 = vmatprep.subr.mxu0 0.0
    %293 = vmatpush1.msra.mxu0 0.0
    %294 = vmatprep.subr.mxu0 0.0
    %295 = vmatpush1.msra.mxu0 0.0
    %296 = vmatprep.subr.mxu0 0.0
    %297 = vmatpush1.msra.mxu0 0.0
    %298 = vmatprep.subr.mxu0 0.0
    %299 = vmatpush1.msra.mxu0 0.0
    %300 = vmatprep.subr.mxu0 0.0
    %301 = vmatpush1.msra.mxu0 0.0
    %302 = vmatprep.subr.mxu0 0.0
    %303 = vmatpush1.msra.mxu0 0.0
    %304 = vmatprep.subr.mxu0 0.0
    %305 = vmatpush1.msra.mxu0 0.0
    %306 = vmatprep.subr.mxu0 0.0
    %307 = vmatpush1.msra.mxu0 0.0
    %308 = vmatprep.subr.mxu0 0.0
    %309 = vmatpush1.msra.mxu0 0.0
    %310 = vmatprep.subr.mxu0 0.0
    %311 = vmatpush1.msra.mxu0 0.0
    %312 = vmatprep.subr.mxu0 0.0
    %313 = vmatpush1.msra.mxu0 0.0
    %314 = vmatprep.subr.mxu0 0.0
    %315 = vmatpush1.msra.mxu0 0.0
    %316 = vmatprep.mubr.f32.mxu0 0.0
    %317 = vmatmul.mubr.f32.gmra.mrb[0].mxu0 %v247
    %v318 = vpop.f32.mrb[0].mxu0
    %v319 = vadd.f32 %v251, %v318
    %v320 = vpop.f32.mrb[0].mxu0
    %321 = vdwg.mxu0
    %v322 = vmax.f32 %v319, 0.0
    %v323 = vlaneseq
    %v324 = vshrl.u32 %v323, 7
    %v325 = vsub.s32 3, %v324
    %v326 = vrot.slane %v92, %v325
    %327 = vmatprep.subr.mxu0 0.0
    %328 = vmatpush1.msra.mxu0 %v76
    %329 = vmatprep.subr.mxu0 0.0
    %330 = vmatpush1.msra.mxu0 %v77
    %331 = vmatprep.subr.mxu0 0.0
    %332 = vmatpush1.msra.mxu0 %v78
    %333 = vmatprep.subr.mxu0 0.0
    %334 = vmatpush1.msra.mxu0 %v79
    %335 = vmatprep.subr.mxu0 0.0
    %336 = vmatpush1.msra.mxu0 %v80
    %337 = vmatprep.subr.mxu0 0.0
    %338 = vmatpush1.msra.mxu0 %v81
    %339 = vmatprep.subr.mxu0 0.0
    %340 = vmatpush1.msra.mxu0 %v82
    %341 = vmatprep.subr.mxu0 0.0
    %342 = vmatpush1.msra.mxu0 %v83
    %343 = vmatprep.subr.mxu0 0.0
    %344 = vmatpush1.msra.mxu0 %v84
    %345 = vmatprep.subr.mxu0 0.0
    %346 = vmatpush1.msra.mxu0 %v85
    %347 = vmatprep.subr.mxu0 0.0
    %348 = vmatpush1.msra.mxu0 %v86
    %349 = vmatprep.subr.mxu0 0.0
    %350 = vmatpush1.msra.mxu0 %v87
    %351 = vmatprep.subr.mxu0 0.0
    %352 = vmatpush1.msra.mxu0 %v88
    %353 = vmatprep.subr.mxu0 0.0
    %354 = vmatpush1.msra.mxu0 %v89
    %355 = vmatprep.subr.mxu0 0.0
    %356 = vmatpush1.msra.mxu0 %v90
    %357 = vmatprep.subr.mxu0 0.0
    %358 = vmatpush1.msra.mxu0 %v91
    %359 = vmatprep.subr.mxu0 0.0
    %360 = vmatpush1.msra.mxu0 0.0
    %361 = vmatprep.subr.mxu0 0.0
    %362 = vmatpush1.msra.mxu0 0.0
    %363 = vmatprep.subr.mxu0 0.0
    %364 = vmatpush1.msra.mxu0 0.0
    %365 = vmatprep.subr.mxu0 0.0
    %366 = vmatpush1.msra.mxu0 0.0
    %367 = vmatprep.subr.mxu0 0.0
    %368 = vmatpush1.msra.mxu0 0.0
    %369 = vmatprep.subr.mxu0 0.0
    %370 = vmatpush1.msra.mxu0 0.0
    %371 = vmatprep.subr.mxu0 0.0
    %372 = vmatpush1.msra.mxu0 0.0
    %373 = vmatprep.subr.mxu0 0.0
    %374 = vmatpush1.msra.mxu0 0.0
    %375 = vmatprep.subr.mxu0 0.0
    %376 = vmatpush1.msra.mxu0 0.0
    %377 = vmatprep.subr.mxu0 0.0
    %378 = vmatpush1.msra.mxu0 0.0
    %379 = vmatprep.subr.mxu0 0.0
    %380 = vmatpush1.msra.mxu0 0.0
    %381 = vmatprep.subr.mxu0 0.0
    %382 = vmatpush1.msra.mxu0 0.0
    %383 = vmatprep.subr.mxu0 0.0
    %384 = vmatpush1.msra.mxu0 0.0
    %385 = vmatprep.subr.mxu0 0.0
    %386 = vmatpush1.msra.mxu0 0.0
    %387 = vmatprep.subr.mxu0 0.0
    %388 = vmatpush1.msra.mxu0 0.0
    %389 = vmatprep.subr.mxu0 0.0
    %390 = vmatpush1.msra.mxu0 0.0
    %391 = vmatprep.mubr.f32.mxu0 0.0
    %392 = vmatmul.mubr.f32.gmra.mrb[0].mxu0 %v322
    %v393 = vpop.f32.mrb[0].mxu0
    %v394 = vadd.f32 %v326, %v393
    %v395 = vpop.f32.mrb[0].mxu0
    %396 = vdwg.mxu0
    %397 = vmax.xlane.f32.xlu0 %v394
    %v398 = vpop.xlane.xlu0 %397
    %v399 = vsub.f32 %v394, %v398
    %v400 = vmul.f32 %v399, 1.442695
    %v401 = vpow.pop %v400
    %402 = vadd.xlane.f32.xlu0 %v401
    %v403 = vpop.xlane.xlu0 %402
    %v404 = vrcp.pop %v403
    %v405 = vmul.f32 %v401, %v404
    %vm406 = vcmask 15360
    %407 = vst.msk [vmem:[%s3] sm:$0xff] %vm406, %v405
    // Predicated region
    $region22: #{tpu_custom_call.1} parent=1 // pred_check
      _
    $region23: #{tpu_custom_call.1} parent=1 // pred_check_branch
      %409 = sbr.rel (0) target = $region25
    $region24: #{tpu_custom_call.1} parent=1 // pred_region
      _
    $region25: #{tpu_custom_call.1} parent=1 // pred_fallthru
      _
    // Predicated region
    $region26: #{tpu_custom_call.1} parent=1 // pred_check
      _
    $region27: #{tpu_custom_call.1} parent=1 // pred_check_branch
      %411 = sbr.rel (0) target = $region29
    $region28: #{tpu_custom_call.1} parent=1 // pred_region
      _
    $region29: #{tpu_custom_call.1} parent=1 // pred_fallthru
      _
    %412 = vsyncpa [#allocation3], 1
    %413 = vsyncpa [#allocation5], 1

</llo_original>
